<compile_context>
chip_gen: v5e
topology: v5e:2x2
jax: 0.10.0
libtpu: 0.0.40
codegen_flags: <defaults>
</compile_context>

<pallas_src>
import jax
import jax.numpy as jnp
from jax.experimental import pallas as pl
from jax.experimental.pallas import tpu as pltpu


def _round_up(x, m):
    return (x + m - 1) // m * m


def _make_kernel(n_rest, max_unrolled_layers=4):
    """Kernel for one batch tile: whole MLP + all (padded) heads in one pass."""
    use_fori = n_rest > max_unrolled_layers

    def kernel(x_ref, w0_ref, b_all_ref, *rest):
        # rest = ([w_rest_ref,] head_w_ref, head_b_ref, out_ref)
        if n_rest > 0:
            w_rest_ref, head_w_ref, head_b_ref, out_ref = rest
        else:
            head_w_ref, head_b_ref, out_ref = rest
            w_rest_ref = None

        # first hidden layer: [TB, in] @ [in, H] (bf16 operands, f32 accumulate)
        h = jnp.maximum(
            jnp.dot(x_ref[...], w0_ref[...], preferred_element_type=jnp.float32)
            + b_all_ref[0],
            0.0,
        )

        if n_rest > 0:
            def layer(l, h):
                w = w_rest_ref[l]                       # [H, H], one layer live
                return jnp.maximum(
                    jnp.dot(h.astype(w.dtype), w,
                            preferred_element_type=jnp.float32)
                    + b_all_ref[l + 1],
                    0.0,
                )

            if use_fori:
                # deep nets: bounded live ranges, dynamic leading-axis indexing
                h = jax.lax.fori_loop(0, n_rest, layer, h)
            else:
                # shallow nets: static unroll for full scheduler visibility
                for l in range(n_rest):
                    h = layer(l, h)

        # all heads at once -> lane-dense (TB, OUT_PAD) store (no masked vst)
        # (last_activation is None in the reference default -> no final nonlin.)
        out_ref[...] = (
            jnp.dot(h.astype(head_w_ref.dtype), head_w_ref[...],
                    preferred_element_type=jnp.float32)
            + head_b_ref[...]
        )

    return kernel


def causal_network_forward(x, w0, b_all, w_rest, head_w, head_b, index,
                           *, block_batch=1024, compute_dtype=jnp.bfloat16):
    """Pallas forward of Causal_Network.forward(x, index) -> [B, 1]."""
    B, input_dim = x.shape
    hidden_dim = w0.shape[1]
    output_dim = head_w.shape[1]
    n_rest = 0 if w_rest is None else w_rest.shape[0]

    elt = jnp.dtype(compute_dtype).itemsize
    sub = 16 if elt < 4 else 8                      # sublane packing granularity

    # ---- lane-dense head slab: zero-pad heads to a multiple of 128 lanes -----
    out_pad = max(128, _round_up(output_dim, 128))
    head_w_p = jnp.zeros((hidden_dim, out_pad), head_w.dtype)
    head_w_p = head_w_p.at[:, :output_dim].set(head_w)
    head_b_p = jnp.zeros((1, out_pad), head_b.dtype)
    head_b_p = head_b_p.at[:, :output_dim].set(head_b)

    # ---- batch tiling: big tiles, grid=(1,) whenever the batch fits ----------
    b_pad = _round_up(B, sub)
    tb = _round_up(min(block_batch, b_pad), sub)
    b_pad = _round_up(b_pad, tb)
    grid = (b_pad // tb,)
    x_p = x if b_pad == B else jnp.pad(x, ((0, b_pad - B), (0, 0)))

    # ---- bf16 MXU operands (cast once, outside the kernel); biases stay f32 --
    x_p = x_p.astype(compute_dtype)
    w0_c = w0.astype(compute_dtype)
    w_rest_c = None if n_rest == 0 else w_rest.astype(compute_dtype)
    head_w_c = head_w_p.astype(compute_dtype)

    kernel = _make_kernel(n_rest)

    # x / out are tiled over batch; every parameter uses a constant index_map so
    # it is DMA'd once and stays VMEM-resident for all grid steps.
    in_specs = [
        pl.BlockSpec((tb, input_dim), lambda i: (i, 0)),
        pl.BlockSpec(w0_c.shape, lambda i: (0, 0)),
        pl.BlockSpec(b_all.shape, lambda i: (0, 0, 0)),
    ]
    args = [x_p, w0_c, b_all]
    if n_rest > 0:
        in_specs.append(pl.BlockSpec(w_rest_c.shape, lambda i: (0, 0, 0)))
        args.append(w_rest_c)
    in_specs += [
        pl.BlockSpec(head_w_c.shape, lambda i: (0, 0)),
        pl.BlockSpec(head_b_p.shape, lambda i: (0, 0)),
    ]
    args += [head_w_c, head_b_p]

    out_spec = pl.BlockSpec((tb, out_pad), lambda i: (i, 0))

    # megacore sharding only pays off with >= 2 even steps per TensorCore
    n_steps = grid[0]
    dims = ("parallel",) if (n_steps >= 4 and n_steps % 2 == 0) else ("arbitrary",)

    # raise the scoped-VMEM limit only when the resident footprint needs it
    weight_bytes = (w0_c.size + (w_rest_c.size if n_rest else 0)
                    + head_w_c.size) * elt
    bias_bytes = (b_all.size + head_b_p.size) * 4
    io_bytes = tb * input_dim * elt + tb * out_pad * 4
    act_bytes = 4 * tb * hidden_dim * 4
    vmem_needed = 2 * (weight_bytes + bias_bytes + io_bytes) + act_bytes
    cp_kwargs = dict(dimension_semantics=dims)
    if vmem_needed > (32 << 20):
        cp_kwargs["vmem_limit_bytes"] = int(min(vmem_needed + (4 << 20), 100 << 20))

    flops = 2 * b_pad * (input_dim * hidden_dim
                         + n_rest * hidden_dim * hidden_dim
                         + hidden_dim * out_pad)
    bytes_accessed = int(x_p.size * elt + weight_bytes + bias_bytes
                         + b_pad * out_pad * 4)

    out_all = pl.pallas_call(
        kernel,
        out_shape=jax.ShapeDtypeStruct((b_pad, out_pad), jnp.float32),
        grid=grid,
        in_specs=in_specs,
        out_specs=out_spec,
        compiler_params=pltpu.CompilerParams(**cp_kwargs),
        cost_estimate=pl.CostEstimate(
            flops=flops, transcendentals=0, bytes_accessed=bytes_accessed),
    )(*args)

    # head selection + batch un-padding is a cheap slice outside the kernel;
    # computing all (padded) heads keeps the kernel's store lane-dense.
    out_all = out_all[:B]
    return jax.lax.dynamic_slice_in_dim(out_all, index, 1, axis=1)


def orthogonal_init(key, out_features, in_features):
    """Orthogonal init (semantics of nn.init.orthogonal_), returned as [in, out]."""
    rows, cols = max(out_features, in_features), min(out_features, in_features)
    a = jax.random.normal(key, (rows, cols), dtype=jnp.float32)
    q, r = jnp.linalg.qr(a)
    d = jnp.diag(r)
    # sign fix: jnp.sign(0) == 0 would zero columns; use a +/-1 factor instead.
    q = q * jnp.where(d >= 0.0, 1.0, -1.0)[None, :]
    if out_features < in_features:
        q = q.T
    w_torch_layout = q[:out_features, :in_features]  # [out, in]
    return w_torch_layout.T                          # [in, out] for x @ W


def build_params(key, layer_num, input_dim, output_dim, hidden_dim):
    """Mirror Causal_Network.__init__ parameter shapes, packed for few large DMAs."""
    layers_unit = [input_dim] + [hidden_dim] * (layer_num - 1)
    n_hidden = len(layers_unit) - 1
    keys = jax.random.split(key, n_hidden + output_dim)
    k = 0
    # first hidden layer: [input_dim, hidden]
    w0 = orthogonal_init(keys[k], layers_unit[1], layers_unit[0]); k += 1
    # remaining hidden layers are all [hidden, hidden] -> one packed array
    rest = []
    for idx in range(1, n_hidden):
        rest.append(orthogonal_init(keys[k], layers_unit[idx + 1], layers_unit[idx]))
        k += 1
    w_rest = jnp.stack(rest, axis=0) if rest else None    # [n_hidden-1, H, H]
    # hidden biases (zero init), shaped [n_hidden, 1, H] so dynamic per-layer
    # indexing inside the kernel hits a leading (non-tiled) axis.
    b_all = jnp.zeros((n_hidden, 1, hidden_dim), dtype=jnp.float32)
    # heads: pack all output_dim heads as columns of one matrix
    head_cols = [orthogonal_init(keys[k + j], 1, hidden_dim) for j in range(output_dim)]
    head_w = jnp.concatenate(head_cols, axis=1)            # [hidden, output_dim]
    head_b = jnp.zeros((1, output_dim), dtype=jnp.float32)
    return w0, b_all, w_rest, head_w, head_b


def reference_forward(x, w0, b_all, w_rest, head_w, head_b, index,
                      compute_dtype=jnp.bfloat16):
    """Pure-JAX reference mirroring the kernel's bf16-operand / f32-acc numerics."""
    cd = compute_dtype
    h = jnp.maximum(
        jnp.dot(x.astype(cd), w0.astype(cd), preferred_element_type=jnp.float32)
        + b_all[0], 0.0)
    n_rest = 0 if w_rest is None else w_rest.shape[0]
    for l in range(n_rest):
        h = jnp.maximum(
            jnp.dot(h.astype(cd), w_rest[l].astype(cd),
                    preferred_element_type=jnp.float32) + b_all[l + 1], 0.0)
    out = (jnp.dot(h.astype(cd), head_w.astype(cd),
                   preferred_element_type=jnp.float32) + head_b)
    return out[:, index:index + 1]


if __name__ == "__main__":
    # --- config 1: shallow net, aligned batch (static-unroll path, grid=(1,)) --
    layer_num, input_dim, output_dim, hidden_dim = 3, 16, 4, 32
    batch, index = 256, 2

    key = jax.random.PRNGKey(0)
    kx, kp = jax.random.split(key)
    x = jax.random.normal(kx, (batch, input_dim), dtype=jnp.float32)
    w0, b_all, w_rest, head_w, head_b = build_params(
        kp, layer_num, input_dim, output_dim, hidden_dim)

    out = causal_network_forward(x, w0, b_all, w_rest, head_w, head_b, index)
    out = jax.block_until_ready(out)
    ref = reference_forward(x, w0, b_all, w_rest, head_w, head_b, index)
    assert out.shape == (batch, 1)
    assert jnp.allclose(out, ref, atol=1e-3, rtol=1e-3), "mismatch vs JAX reference"

    # --- config 2: deeper net + ragged batch (fori_loop path, batch padding) ---
    layer_num2, batch2, index2 = 7, 194, 1
    k2x, k2p = jax.random.split(jax.random.PRNGKey(1))
    x2 = jax.random.normal(k2x, (batch2, input_dim), dtype=jnp.float32)
    params2 = build_params(k2p, layer_num2, input_dim, output_dim, hidden_dim)
    out2 = jax.block_until_ready(causal_network_forward(x2, *params2, index2))
    ref2 = reference_forward(x2, *params2, index2)
    assert out2.shape == (batch2, 1)
    assert jnp.allclose(out2, ref2, atol=1e-3, rtol=1e-3), "mismatch (deep/ragged)"

    print("KERNEL_OK")
</pallas_src>

<mosaic_0001>
module attributes {stable_mosaic.version = 11 : i64} {
  func.func @kernel(%arg0: i32, %arg1: memref<256x16xbf16, #tpu.memory_space<vmem>>, %arg2: memref<16x32xbf16, #tpu.memory_space<vmem>>, %arg3: memref<2x1x32xf32, #tpu.memory_space<vmem>>, %arg4: memref<1x32x32xbf16, #tpu.memory_space<vmem>>, %arg5: memref<32x128xbf16, #tpu.memory_space<vmem>>, %arg6: memref<1x128xf32, #tpu.memory_space<vmem>>, %arg7: memref<256x128xf32, #tpu.memory_space<vmem>>) attributes {dimension_semantics = [#tpu.dimension_semantics<arbitrary>], iteration_bounds = array<i64: 1>, scalar_prefetch = 0 : i64, scratch_operands = 0 : i64, tpu.core_type = #tpu.core_type<tc>, window_params = [{transform_indices = @transform_0, window_bounds = array<i64: 256, 16>}, {pipeline_mode = #tpu.pipeline_mode<synchronous>, transform_indices = @transform_1, window_bounds = array<i64: 16, 32>}, {pipeline_mode = #tpu.pipeline_mode<synchronous>, transform_indices = @transform_2, window_bounds = array<i64: 2, 1, 32>}, {pipeline_mode = #tpu.pipeline_mode<synchronous>, transform_indices = @transform_3, window_bounds = array<i64: 1, 32, 32>}, {pipeline_mode = #tpu.pipeline_mode<synchronous>, transform_indices = @transform_4, window_bounds = array<i64: 32, 128>}, {pipeline_mode = #tpu.pipeline_mode<synchronous>, transform_indices = @transform_5, window_bounds = array<i64: 1, 128>}, {transform_indices = @transform_6, window_bounds = array<i64: 256, 128>}]} {
    %c0 = arith.constant 0 : index
    %c0_0 = arith.constant 0 : index
    %0 = vector.load %arg1[%c0, %c0_0] : memref<256x16xbf16, #tpu.memory_space<vmem>>, vector<256x16xbf16>
    %c0_1 = arith.constant 0 : index
    %c0_2 = arith.constant 0 : index
    %1 = vector.load %arg2[%c0_1, %c0_2] : memref<16x32xbf16, #tpu.memory_space<vmem>>, vector<16x32xbf16>
    %cst = arith.constant dense<0.000000e+00> : vector<256x32xf32>
    %2 = tpu.matmul %0, %1, %cst {dimension_numbers = #tpu.dot_dimension_numbers<[1], [0], [0], [1], [0, 0, 1, 1], [], []>} : vector<256x16xbf16>, vector<16x32xbf16>, vector<256x32xf32> -> vector<256x32xf32>
    %c0_3 = arith.constant 0 : index
    %c0_4 = arith.constant 0 : index
    %c0_5 = arith.constant 0 : index
    %3 = vector.load %arg3[%c0_3, %c0_4, %c0_5] : memref<2x1x32xf32, #tpu.memory_space<vmem>>, vector<1x1x32xf32>
    %4 = vector.shape_cast %3 : vector<1x1x32xf32> to vector<1x32xf32>
    %5 = vector.broadcast %4 : vector<1x32xf32> to vector<256x32xf32>
    %6 = arith.addf %2, %5 : vector<256x32xf32>
    %cst_6 = arith.constant 0.000000e+00 : f32
    %7 = vector.broadcast %cst_6 : f32 to vector<256x32xf32>
    %8 = arith.maximumf %6, %7 : vector<256x32xf32>
    %c0_7 = arith.constant 0 : index
    %c0_8 = arith.constant 0 : index
    %c0_9 = arith.constant 0 : index
    %9 = vector.load %arg4[%c0_7, %c0_8, %c0_9] : memref<1x32x32xbf16, #tpu.memory_space<vmem>>, vector<1x32x32xbf16>
    %10 = vector.shape_cast %9 : vector<1x32x32xbf16> to vector<32x32xbf16>
    %11 = arith.truncf %8 : vector<256x32xf32> to vector<256x32xbf16>
    %cst_10 = arith.constant dense<0.000000e+00> : vector<256x32xf32>
    %12 = tpu.matmul %11, %10, %cst_10 {dimension_numbers = #tpu.dot_dimension_numbers<[1], [0], [0], [1], [0, 0, 1, 1], [], []>} : vector<256x32xbf16>, vector<32x32xbf16>, vector<256x32xf32> -> vector<256x32xf32>
    %c1 = arith.constant 1 : index
    %c0_11 = arith.constant 0 : index
    %c0_12 = arith.constant 0 : index
    %13 = vector.load %arg3[%c1, %c0_11, %c0_12] : memref<2x1x32xf32, #tpu.memory_space<vmem>>, vector<1x1x32xf32>
    %14 = vector.shape_cast %13 : vector<1x1x32xf32> to vector<1x32xf32>
    %15 = vector.broadcast %14 : vector<1x32xf32> to vector<256x32xf32>
    %16 = arith.addf %12, %15 : vector<256x32xf32>
    %cst_13 = arith.constant 0.000000e+00 : f32
    %17 = vector.broadcast %cst_13 : f32 to vector<256x32xf32>
    %18 = arith.maximumf %16, %17 : vector<256x32xf32>
    %19 = arith.truncf %18 : vector<256x32xf32> to vector<256x32xbf16>
    %c0_14 = arith.constant 0 : index
    %c0_15 = arith.constant 0 : index
    %20 = vector.load %arg5[%c0_14, %c0_15] : memref<32x128xbf16, #tpu.memory_space<vmem>>, vector<32x128xbf16>
    %cst_16 = arith.constant dense<0.000000e+00> : vector<256x128xf32>
    %21 = tpu.matmul %19, %20, %cst_16 {dimension_numbers = #tpu.dot_dimension_numbers<[1], [0], [0], [1], [0, 0, 1, 1], [], []>} : vector<256x32xbf16>, vector<32x128xbf16>, vector<256x128xf32> -> vector<256x128xf32>
    %c0_17 = arith.constant 0 : index
    %c0_18 = arith.constant 0 : index
    %22 = vector.load %arg6[%c0_17, %c0_18] : memref<1x128xf32, #tpu.memory_space<vmem>>, vector<1x128xf32>
    %23 = vector.broadcast %22 : vector<1x128xf32> to vector<256x128xf32>
    %24 = arith.addf %21, %23 : vector<256x128xf32>
    %c0_19 = arith.constant 0 : index
    %c0_20 = arith.constant 0 : index
    %25 = vector.load %arg7[%c0_19, %c0_20] : memref<256x128xf32, #tpu.memory_space<vmem>>, vector<256x128xf32>
    tpu.vector_store %arg7[%c0_19, %c0_20], %24 {strides = array<i32>} : memref<256x128xf32, #tpu.memory_space<vmem>>, vector<256x128xf32>,
    return
  }
  func.func @transform_0(%arg0: i32) -> (i32, i32) {
    %c0_i32 = arith.constant 0 : i32
    %c0_i32_0 = arith.constant 0 : i32
    return %arg0, %c0_i32 : i32, i32
  }
  func.func @transform_1(%arg0: i32) -> (i32, i32) {
    %c0_i32 = arith.constant 0 : i32
    %c0_i32_0 = arith.constant 0 : i32
    %c0_i32_1 = arith.constant 0 : i32
    return %c0_i32, %c0_i32_0 : i32, i32
  }
  func.func @transform_2(%arg0: i32) -> (i32, i32, i32) {
    %c0_i32 = arith.constant 0 : i32
    %c0_i32_0 = arith.constant 0 : i32
    %c0_i32_1 = arith.constant 0 : i32
    %c0_i32_2 = arith.constant 0 : i32
    return %c0_i32, %c0_i32_0, %c0_i32_1 : i32, i32, i32
  }
  func.func @transform_3(%arg0: i32) -> (i32, i32, i32) {
    %c0_i32 = arith.constant 0 : i32
    %c0_i32_0 = arith.constant 0 : i32
    %c0_i32_1 = arith.constant 0 : i32
    %c0_i32_2 = arith.constant 0 : i32
    return %c0_i32, %c0_i32_0, %c0_i32_1 : i32, i32, i32
  }
  func.func @transform_4(%arg0: i32) -> (i32, i32) {
    %c0_i32 = arith.constant 0 : i32
    %c0_i32_0 = arith.constant 0 : i32
    %c0_i32_1 = arith.constant 0 : i32
    return %c0_i32, %c0_i32_0 : i32, i32
  }
  func.func @transform_5(%arg0: i32) -> (i32, i32) {
    %c0_i32 = arith.constant 0 : i32
    %c0_i32_0 = arith.constant 0 : i32
    %c0_i32_1 = arith.constant 0 : i32
    return %c0_i32, %c0_i32_0 : i32, i32
  }
  func.func @transform_6(%arg0: i32) -> (i32, i32) {
    %c0_i32 = arith.constant 0 : i32
    %c0_i32_0 = arith.constant 0 : i32
    return %arg0, %c0_i32 : i32, i32
  }
}

</mosaic_0001>

<llo_original>
// kernel: tpu_custom_call.1
$region0: #{tpu_custom_call.1}
  #allocation0 [shape = 'u32[]', space=smem, size = 0x4, offset = 0x4, fixed_abs, tag = 'smem constant byte address 0x4 - core index']
  #allocation1 [shape = 'u32[72,128]{1,0:T(1,128)}', space=vmem, size = 0x9000, scoped, tag = 'internal scratch']
  %s0 = inlined_call_operand.vmem [shape: bf16[256,16], index: 0, kind: input, shape index: {}]
  %s1 = inlined_call_operand.vmem [shape: bf16[16,32], index: 1, kind: input, shape index: {}]
  %s2 = inlined_call_operand.vmem [shape: f32[2,1,32], index: 2, kind: input, shape index: {}]
  %s3 = inlined_call_operand.vmem [shape: bf16[1,32,32], index: 3, kind: input, shape index: {}]
  %s4 = inlined_call_operand.vmem [shape: bf16[32,128], index: 4, kind: input, shape index: {}]
  %s5 = inlined_call_operand.vmem [shape: f32[1,128], index: 5, kind: input, shape index: {}]
  %s6 = inlined_call_operand.hbm [shape: f32[256,128], index: 6, kind: output, shape index: {}]
  %s7 = sld [smem:[#allocation0]]
  $region34: #{tpu_custom_call.1} parent=0
    _
  %s9 = ssub.s32 1, %s7
  %s10 = scalar_select 0, %s9, %s7
  $region1: #{tpu_custom_call.1} parent=0
    #allocation2 [shape = 'u8[131072]{0}', space=vmem, size = 0x20000, scoped, tag = 'output window, operand 0, single buffered']
    #allocation3 [shape = 's32[1]{0}', space=sflag, size = 0x4, scoped, tag = 'scoped memory for tpu_custom_call.1']
    %11 = vsyncpa [#allocation3], 0
    // Predicated region
    $region2: #{tpu_custom_call.1} parent=1 // pred_check
      _
    $region3: #{tpu_custom_call.1} parent=1 // pred_check_branch
      %13 = sbr.rel (0) target = $region5
    $region4: #{tpu_custom_call.1} parent=1 // pred_region
      _
    $region5: #{tpu_custom_call.1} parent=1 // pred_fallthru
      _
    // Predicated region
    $region6: #{tpu_custom_call.1} parent=1 // pred_check
      _
    $region7: #{tpu_custom_call.1} parent=1 // pred_check_branch
      %15 = sbr.rel (0) target = $region9
    $region8: #{tpu_custom_call.1} parent=1 // pred_region
      _
    $region9: #{tpu_custom_call.1} parent=1 // pred_fallthru
      _
    // Predicated region
    $region10: #{tpu_custom_call.1} parent=1 // pred_check
      _
    $region11: #{tpu_custom_call.1} parent=1 // pred_check_branch
      %17 = sbr.rel (0) target = $region13
    $region12: #{tpu_custom_call.1} parent=1 // pred_region
      _
    $region13: #{tpu_custom_call.1} parent=1 // pred_fallthru
      _
    // Predicated region
    $region14: #{tpu_custom_call.1} parent=1 // pred_check
      _
    $region15: #{tpu_custom_call.1} parent=1 // pred_check_branch
      %19 = sbr.rel (0) target = $region17
    $region16: #{tpu_custom_call.1} parent=1 // pred_region
      _
    $region17: #{tpu_custom_call.1} parent=1 // pred_fallthru
      _
    // Predicated region
    $region18: #{tpu_custom_call.1} parent=1 // pred_check
      _
    $region19: #{tpu_custom_call.1} parent=1 // pred_check_branch
      %21 = sbr.rel (0) target = $region21
    $region20: #{tpu_custom_call.1} parent=1 // pred_region
      _
    $region21: #{tpu_custom_call.1} parent=1 // pred_fallthru
      _
    // Predicated region
    $region22: #{tpu_custom_call.1} parent=1 // pred_check
      _
    $region23: #{tpu_custom_call.1} parent=1 // pred_check_branch
      %23 = sbr.rel (0) target = $region25
    $region24: #{tpu_custom_call.1} parent=1 // pred_region
      _
    $region25: #{tpu_custom_call.1} parent=1 // pred_fallthru
      _
    %v25 = vld [vmem:[%s0] sm:$0xf]
    %v26 = vld [vmem:[%s0 + $0x4] sm:$0xf]
    %v27 = vld [vmem:[%s0 + $0x8] sm:$0xf]
    %v28 = vld [vmem:[%s0 + $0xc] sm:$0xf]
    %v29 = vld [vmem:[%s0 + $0x10] sm:$0xf]
    %v30 = vld [vmem:[%s0 + $0x14] sm:$0xf]
    %v31 = vld [vmem:[%s0 + $0x18] sm:$0xf]
    %v32 = vld [vmem:[%s0 + $0x1c] sm:$0xf]
    %v33 = vld [vmem:[%s0 + $0x20] sm:$0xf]
    %v34 = vld [vmem:[%s0 + $0x24] sm:$0xf]
    %v35 = vld [vmem:[%s0 + $0x28] sm:$0xf]
    %v36 = vld [vmem:[%s0 + $0x2c] sm:$0xf]
    %v37 = vld [vmem:[%s0 + $0x30] sm:$0xf]
    %v38 = vld [vmem:[%s0 + $0x34] sm:$0xf]
    %v39 = vld [vmem:[%s0 + $0x38] sm:$0xf]
    %v40 = vld [vmem:[%s0 + $0x3c] sm:$0xf]
    %v41 = vld [vmem:[%s0 + $0x40] sm:$0xf]
    %v42 = vld [vmem:[%s0 + $0x44] sm:$0xf]
    %v43 = vld [vmem:[%s0 + $0x48] sm:$0xf]
    %v44 = vld [vmem:[%s0 + $0x4c] sm:$0xf]
    %v45 = vld [vmem:[%s0 + $0x50] sm:$0xf]
    %v46 = vld [vmem:[%s0 + $0x54] sm:$0xf]
    %v47 = vld [vmem:[%s0 + $0x58] sm:$0xf]
    %v48 = vld [vmem:[%s0 + $0x5c] sm:$0xf]
    %v49 = vld [vmem:[%s0 + $0x60] sm:$0xf]
    %v50 = vld [vmem:[%s0 + $0x64] sm:$0xf]
    %v51 = vld [vmem:[%s0 + $0x68] sm:$0xf]
    %v52 = vld [vmem:[%s0 + $0x6c] sm:$0xf]
    %v53 = vld [vmem:[%s0 + $0x70] sm:$0xf]
    %v54 = vld [vmem:[%s0 + $0x74] sm:$0xf]
    %v55 = vld [vmem:[%s0 + $0x78] sm:$0xf]
    %v56 = vld [vmem:[%s0 + $0x7c] sm:$0xf]
    %v57 = vld [vmem:[%s1] sm:$0xf]
    %v58 = vld [vmem:[%s1 + $0x4] sm:$0xf]
    %v59 = vld [vmem:[%s2] sm:$0x1]
    %v61 = vperm.slane %v59, 0
    %v95 = vunpack.c.l.b16 %v25
    %v96 = vunpack.c.l.b16 %v26
    %v97 = vunpack.c.l.b16 %v27
    %v98 = vunpack.c.l.b16 %v28
    %v99 = vunpack.c.l.b16 %v29
    %v100 = vunpack.c.l.b16 %v30
    %v101 = vunpack.c.l.b16 %v31
    %v102 = vunpack.c.l.b16 %v32
    %v103 = vunpack.c.l.b16 %v33
    %v104 = vunpack.c.l.b16 %v34
    %v105 = vunpack.c.l.b16 %v35
    %v106 = vunpack.c.l.b16 %v36
    %v107 = vunpack.c.l.b16 %v37
    %v108 = vunpack.c.l.b16 %v38
    %v109 = vunpack.c.l.b16 %v39
    %v110 = vunpack.c.l.b16 %v40
    %v111 = vunpack.c.l.b16 %v41
    %v112 = vunpack.c.l.b16 %v42
    %v113 = vunpack.c.l.b16 %v43
    %v114 = vunpack.c.l.b16 %v44
    %v115 = vunpack.c.l.b16 %v45
    %v116 = vunpack.c.l.b16 %v46
    %v117 = vunpack.c.l.b16 %v47
    %v118 = vunpack.c.l.b16 %v48
    %v119 = vunpack.c.l.b16 %v49
    %v120 = vunpack.c.l.b16 %v50
    %v121 = vunpack.c.l.b16 %v51
    %v122 = vunpack.c.l.b16 %v52
    %v123 = vunpack.c.l.b16 %v53
    %v124 = vunpack.c.l.b16 %v54
    %v125 = vunpack.c.l.b16 %v55
    %v126 = vunpack.c.l.b16 %v56
    %v127 = vpack.c.b16 %v96, %v95
    %v128 = vpack.c.b16 %v98, %v97
    %v129 = vpack.c.b16 %v100, %v99
    %v130 = vpack.c.b16 %v102, %v101
    %v131 = vpack.c.b16 %v104, %v103
    %v132 = vpack.c.b16 %v106, %v105
    %v133 = vpack.c.b16 %v108, %v107
    %v134 = vpack.c.b16 %v110, %v109
    %v135 = vpack.c.b16 %v112, %v111
    %v136 = vpack.c.b16 %v114, %v113
    %v137 = vpack.c.b16 %v116, %v115
    %v138 = vpack.c.b16 %v118, %v117
    %v139 = vpack.c.b16 %v120, %v119
    %v140 = vpack.c.b16 %v122, %v121
    %v141 = vpack.c.b16 %v124, %v123
    %v142 = vpack.c.b16 %v126, %v125
    %v145 = vunpack.c.l.b16 %v57
    %v146 = vunpack.c.l.b16 %v58
    %v147 = vpack.c.b16 %v146, %v145
    %vm149 = vcmask 130048
    %v151 = vsel %vm149, %v127, 0
    %v154 = vsel %vm149, %v128, 0
    %v157 = vsel %vm149, %v129, 0
    %v160 = vsel %vm149, %v130, 0
    %v163 = vsel %vm149, %v131, 0
    %v166 = vsel %vm149, %v132, 0
    %v169 = vsel %vm149, %v133, 0
    %v172 = vsel %vm149, %v134, 0
    %v175 = vsel %vm149, %v135, 0
    %v178 = vsel %vm149, %v136, 0
    %v181 = vsel %vm149, %v137, 0
    %v184 = vsel %vm149, %v138, 0
    %v187 = vsel %vm149, %v139, 0
    %v190 = vsel %vm149, %v140, 0
    %v193 = vsel %vm149, %v141, 0
    %v196 = vsel %vm149, %v142, 0
    %198 = vmatpush.bf16.msra.mxu0 0
    %199 = vmatpush.bf16.msra.mxu0 0
    %200 = vmatpush.bf16.msra.mxu0 0
    %201 = vmatpush.bf16.msra.mxu0 0
    %202 = vmatpush.bf16.msra.mxu0 0
    %203 = vmatpush.bf16.msra.mxu0 0
    %204 = vmatpush.bf16.msra.mxu0 0
    %205 = vmatpush.bf16.msra.mxu0 %v147
    %206 = vmatmul.bf16.gmra.mxu0 %v151
    %v207 = vpop.f32.mrf.mxu0
    %v208 = vadd.f32 %v61, %v207
    %v209 = vpop.f32.mrf.mxu0
    %v210 = vadd.f32 %v61, %v209
    %211 = vmatmul.bf16.gmra.mxu0 %v154
    %v212 = vpop.f32.mrf.mxu0
    %v213 = vadd.f32 %v61, %v212
    %v214 = vpop.f32.mrf.mxu0
    %v215 = vadd.f32 %v61, %v214
    %216 = vmatmul.bf16.gmra.mxu0 %v157
    %v217 = vpop.f32.mrf.mxu0
    %v218 = vadd.f32 %v61, %v217
    %v219 = vpop.f32.mrf.mxu0
    %v220 = vadd.f32 %v61, %v219
    %221 = vmatmul.bf16.gmra.mxu0 %v160
    %v222 = vpop.f32.mrf.mxu0
    %v223 = vadd.f32 %v61, %v222
    %v224 = vpop.f32.mrf.mxu0
    %v225 = vadd.f32 %v61, %v224
    %226 = vmatmul.bf16.gmra.mxu0 %v163
    %v227 = vpop.f32.mrf.mxu0
    %v228 = vadd.f32 %v61, %v227
    %v229 = vpop.f32.mrf.mxu0
    %v230 = vadd.f32 %v61, %v229
    %231 = vmatmul.bf16.gmra.mxu0 %v166
    %v232 = vpop.f32.mrf.mxu0
    %v233 = vadd.f32 %v61, %v232
    %v234 = vpop.f32.mrf.mxu0
    %v235 = vadd.f32 %v61, %v234
    %236 = vmatmul.bf16.gmra.mxu0 %v169
    %v237 = vpop.f32.mrf.mxu0
    %v238 = vadd.f32 %v61, %v237
    %v239 = vpop.f32.mrf.mxu0
    %v240 = vadd.f32 %v61, %v239
    %241 = vmatmul.bf16.gmra.mxu0 %v172
    %v242 = vpop.f32.mrf.mxu0
    %v243 = vadd.f32 %v61, %v242
    %v244 = vpop.f32.mrf.mxu0
    %v245 = vadd.f32 %v61, %v244
    %246 = vmatmul.bf16.gmra.mxu0 %v175
    %v247 = vpop.f32.mrf.mxu0
    %v248 = vadd.f32 %v61, %v247
    %v249 = vpop.f32.mrf.mxu0
    %v250 = vadd.f32 %v61, %v249
    %251 = vmatmul.bf16.gmra.mxu0 %v178
    %v252 = vpop.f32.mrf.mxu0
    %v253 = vadd.f32 %v61, %v252
    %v254 = vpop.f32.mrf.mxu0
    %v255 = vadd.f32 %v61, %v254
    %256 = vmatmul.bf16.gmra.mxu0 %v181
    %v257 = vpop.f32.mrf.mxu0
    %v258 = vadd.f32 %v61, %v257
    %v259 = vpop.f32.mrf.mxu0
    %v260 = vadd.f32 %v61, %v259
    %261 = vmatmul.bf16.gmra.mxu0 %v184
    %v262 = vpop.f32.mrf.mxu0
    %v263 = vadd.f32 %v61, %v262
    %v264 = vpop.f32.mrf.mxu0
    %v265 = vadd.f32 %v61, %v264
    %266 = vmatmul.bf16.gmra.mxu0 %v187
    %v267 = vpop.f32.mrf.mxu0
    %v268 = vadd.f32 %v61, %v267
    %v269 = vpop.f32.mrf.mxu0
    %v270 = vadd.f32 %v61, %v269
    %271 = vmatmul.bf16.gmra.mxu0 %v190
    %v272 = vpop.f32.mrf.mxu0
    %v273 = vadd.f32 %v61, %v272
    %v274 = vpop.f32.mrf.mxu0
    %v275 = vadd.f32 %v61, %v274
    %276 = vmatmul.bf16.gmra.mxu0 %v193
    %v277 = vpop.f32.mrf.mxu0
    %v278 = vadd.f32 %v61, %v277
    %v279 = vpop.f32.mrf.mxu0
    %v280 = vadd.f32 %v61, %v279
    %281 = vmatmul.bf16.gmra.mxu0 %v196
    %v282 = vpop.f32.mrf.mxu0
    %v283 = vadd.f32 %v61, %v282
    %v284 = vpop.f32.mrf.mxu0
    %v285 = vadd.f32 %v61, %v284
    %286 = vdwg.mxu0
    %v287 = vmax.f32 %v208, 0.0
    %v288 = vmax.f32 %v210, 0.0
    %v289 = vmax.f32 %v213, 0.0
    %v290 = vmax.f32 %v215, 0.0
    %v291 = vmax.f32 %v218, 0.0
    %v292 = vmax.f32 %v220, 0.0
    %v293 = vmax.f32 %v223, 0.0
    %v294 = vmax.f32 %v225, 0.0
    %v295 = vmax.f32 %v228, 0.0
    %v296 = vmax.f32 %v230, 0.0
    %v297 = vmax.f32 %v233, 0.0
    %v298 = vmax.f32 %v235, 0.0
    %v299 = vmax.f32 %v238, 0.0
    %v300 = vmax.f32 %v240, 0.0
    %v301 = vmax.f32 %v243, 0.0
    %v302 = vmax.f32 %v245, 0.0
    %v303 = vmax.f32 %v248, 0.0
    %v304 = vmax.f32 %v250, 0.0
    %v305 = vmax.f32 %v253, 0.0
    %v306 = vmax.f32 %v255, 0.0
    %v307 = vmax.f32 %v258, 0.0
    %v308 = vmax.f32 %v260, 0.0
    %v309 = vmax.f32 %v263, 0.0
    %v310 = vmax.f32 %v265, 0.0
    %v311 = vmax.f32 %v268, 0.0
    %v312 = vmax.f32 %v270, 0.0
    %v313 = vmax.f32 %v273, 0.0
    %v314 = vmax.f32 %v275, 0.0
    %v315 = vmax.f32 %v278, 0.0
    %v316 = vmax.f32 %v280, 0.0
    %v317 = vmax.f32 %v283, 0.0
    %v318 = vmax.f32 %v285, 0.0
    %v319 = vld [vmem:[%s3] sm:$0xf]
    %v320 = vld [vmem:[%s3 + $0x4] sm:$0xf]
    %v321 = vld [vmem:[%s3 + $0x8] sm:$0xf]
    %v322 = vld [vmem:[%s3 + $0xc] sm:$0xf]
    %v323 = vpack.c.bf16 %v288, %v287
    %v324 = vpack.c.bf16 %v290, %v289
    %v325 = vpack.c.bf16 %v292, %v291
    %v326 = vpack.c.bf16 %v294, %v293
    %v327 = vpack.c.bf16 %v296, %v295
    %v328 = vpack.c.bf16 %v298, %v297
    %v329 = vpack.c.bf16 %v300, %v299
    %v330 = vpack.c.bf16 %v302, %v301
    %v331 = vpack.c.bf16 %v304, %v303
    %v332 = vpack.c.bf16 %v306, %v305
    %v333 = vpack.c.bf16 %v308, %v307
    %v334 = vpack.c.bf16 %v310, %v309
    %v335 = vpack.c.bf16 %v312, %v311
    %v336 = vpack.c.bf16 %v314, %v313
    %v337 = vpack.c.bf16 %v316, %v315
    %v338 = vpack.c.bf16 %v318, %v317
    %s339 = scalar_lea.vmem %s2, 1
    %v340 = vld [vmem:[%s339] sm:$0x1]
    %v342 = vperm.slane %v340, 0
    %v348 = vunpack.c.l.b16 %v319
    %v349 = vunpack.c.l.b16 %v320
    %v350 = vunpack.c.l.b16 %v321
    %v351 = vunpack.c.l.b16 %v322
    %v352 = vpack.c.b16 %v349, %v348
    %v353 = vpack.c.b16 %v351, %v350
    %vm356 = vcmask 261120
    %v358 = vsel %vm356, %v323, 0
    %v361 = vsel %vm356, %v324, 0
    %v364 = vsel %vm356, %v325, 0
    %v367 = vsel %vm356, %v326, 0
    %v370 = vsel %vm356, %v327, 0
    %v373 = vsel %vm356, %v328, 0
    %v376 = vsel %vm356, %v329, 0
    %v379 = vsel %vm356, %v330, 0
    %v382 = vsel %vm356, %v331, 0
    %v385 = vsel %vm356, %v332, 0
    %v388 = vsel %vm356, %v333, 0
    %v391 = vsel %vm356, %v334, 0
    %v394 = vsel %vm356, %v335, 0
    %v397 = vsel %vm356, %v336, 0
    %v400 = vsel %vm356, %v337, 0
    %v403 = vsel %vm356, %v338, 0
    %405 = vmatpush.bf16.msra.mxu0 0
    %406 = vmatpush.bf16.msra.mxu0 0
    %407 = vmatpush.bf16.msra.mxu0 0
    %408 = vmatpush.bf16.msra.mxu0 0
    %409 = vmatpush.bf16.msra.mxu0 0
    %410 = vmatpush.bf16.msra.mxu0 0
    %411 = vmatpush.bf16.msra.mxu0 %v353
    %412 = vmatpush.bf16.msra.mxu0 %v352
    %413 = vmatmul.bf16.gmra.mxu0 %v358
    %v414 = vpop.f32.mrf.mxu0
    %v415 = vadd.f32 %v342, %v414
    %v416 = vpop.f32.mrf.mxu0
    %v417 = vadd.f32 %v342, %v416
    %418 = vmatmul.bf16.gmra.mxu0 %v361
    %v419 = vpop.f32.mrf.mxu0
    %v420 = vadd.f32 %v342, %v419
    %v421 = vpop.f32.mrf.mxu0
    %v422 = vadd.f32 %v342, %v421
    %423 = vmatmul.bf16.gmra.mxu0 %v364
    %v424 = vpop.f32.mrf.mxu0
    %v425 = vadd.f32 %v342, %v424
    %v426 = vpop.f32.mrf.mxu0
    %v427 = vadd.f32 %v342, %v426
    %428 = vmatmul.bf16.gmra.mxu0 %v367
    %v429 = vpop.f32.mrf.mxu0
    %v430 = vadd.f32 %v342, %v429
    %v431 = vpop.f32.mrf.mxu0
    %v432 = vadd.f32 %v342, %v431
    %433 = vmatmul.bf16.gmra.mxu0 %v370
    %v434 = vpop.f32.mrf.mxu0
    %v435 = vadd.f32 %v342, %v434
    %v436 = vpop.f32.mrf.mxu0
    %v437 = vadd.f32 %v342, %v436
    %438 = vmatmul.bf16.gmra.mxu0 %v373
    %v439 = vpop.f32.mrf.mxu0
    %v440 = vadd.f32 %v342, %v439
    %v441 = vpop.f32.mrf.mxu0
    %v442 = vadd.f32 %v342, %v441
    %443 = vmatmul.bf16.gmra.mxu0 %v376
    %v444 = vpop.f32.mrf.mxu0
    %v445 = vadd.f32 %v342, %v444
    %v446 = vpop.f32.mrf.mxu0
    %v447 = vadd.f32 %v342, %v446
    %448 = vmatmul.bf16.gmra.mxu0 %v379
    %v449 = vpop.f32.mrf.mxu0
    %v450 = vadd.f32 %v342, %v449
    %v451 = vpop.f32.mrf.mxu0
    %v452 = vadd.f32 %v342, %v451
    %453 = vmatmul.bf16.gmra.mxu0 %v382
    %v454 = vpop.f32.mrf.mxu0
    %v455 = vadd.f32 %v342, %v454
    %v456 = vpop.f32.mrf.mxu0
    %v457 = vadd.f32 %v342, %v456
    %458 = vmatmul.bf16.gmra.mxu0 %v385
    %v459 = vpop.f32.mrf.mxu0
    %v460 = vadd.f32 %v342, %v459
    %v461 = vpop.f32.mrf.mxu0
    %v462 = vadd.f32 %v342, %v461
    %463 = vmatmul.bf16.gmra.mxu0 %v388
    %v464 = vpop.f32.mrf.mxu0
    %v465 = vadd.f32 %v342, %v464
    %v466 = vpop.f32.mrf.mxu0
    %v467 = vadd.f32 %v342, %v466
    %468 = vmatmul.bf16.gmra.mxu0 %v391
    %v469 = vpop.f32.mrf.mxu0
    %v470 = vadd.f32 %v342, %v469
    %v471 = vpop.f32.mrf.mxu0
    %v472 = vadd.f32 %v342, %v471
    %473 = vmatmul.bf16.gmra.mxu0 %v394
    %v474 = vpop.f32.mrf.mxu0
    %v475 = vadd.f32 %v342, %v474
    %v476 = vpop.f32.mrf.mxu0
    %v477 = vadd.f32 %v342, %v476
    %478 = vmatmul.bf16.gmra.mxu0 %v397
    %v479 = vpop.f32.mrf.mxu0
    %v480 = vadd.f32 %v342, %v479
    %v481 = vpop.f32.mrf.mxu0
    %v482 = vadd.f32 %v342, %v481
    %483 = vmatmul.bf16.gmra.mxu0 %v400
    %v484 = vpop.f32.mrf.mxu0
    %v485 = vadd.f32 %v342, %v484
    %v486 = vpop.f32.mrf.mxu0
    %v487 = vadd.f32 %v342, %v486
    %488 = vmatmul.bf16.gmra.mxu0 %v403
    %v489 = vpop.f32.mrf.mxu0
    %v490 = vadd.f32 %v342, %v489
    %v491 = vpop.f32.mrf.mxu0
    %v492 = vadd.f32 %v342, %v491
    %493 = vdwg.mxu0
    %v494 = vmax.f32 %v415, 0.0
    %v495 = vmax.f32 %v417, 0.0
    %v496 = vmax.f32 %v420, 0.0
    %v497 = vmax.f32 %v422, 0.0
    %v498 = vmax.f32 %v425, 0.0
    %v499 = vmax.f32 %v427, 0.0
    %v500 = vmax.f32 %v430, 0.0
    %v501 = vmax.f32 %v432, 0.0
    %v502 = vmax.f32 %v435, 0.0
    %v503 = vmax.f32 %v437, 0.0
    %v504 = vmax.f32 %v440, 0.0
    %v505 = vmax.f32 %v442, 0.0
    %v506 = vmax.f32 %v445, 0.0
    %v507 = vmax.f32 %v447, 0.0
    %v508 = vmax.f32 %v450, 0.0
    %v509 = vmax.f32 %v452, 0.0
    %v510 = vmax.f32 %v455, 0.0
    %v511 = vmax.f32 %v457, 0.0
    %v512 = vmax.f32 %v460, 0.0
    %v513 = vmax.f32 %v462, 0.0
    %v514 = vmax.f32 %v465, 0.0
    %v515 = vmax.f32 %v467, 0.0
    %v516 = vmax.f32 %v470, 0.0
    %v517 = vmax.f32 %v472, 0.0
    %v518 = vmax.f32 %v475, 0.0
    %v519 = vmax.f32 %v477, 0.0
    %v520 = vmax.f32 %v480, 0.0
    %v521 = vmax.f32 %v482, 0.0
    %v522 = vmax.f32 %v485, 0.0
    %v523 = vmax.f32 %v487, 0.0
    %v524 = vmax.f32 %v490, 0.0
    %v525 = vmax.f32 %v492, 0.0
    %v526 = vpack.c.bf16 %v495, %v494
    %v527 = vpack.c.bf16 %v497, %v496
    %v528 = vpack.c.bf16 %v499, %v498
    %v529 = vpack.c.bf16 %v501, %v500
    %v530 = vpack.c.bf16 %v503, %v502
    %v531 = vpack.c.bf16 %v505, %v504
    %v532 = vpack.c.bf16 %v507, %v506
    %v533 = vpack.c.bf16 %v509, %v508
    %v534 = vpack.c.bf16 %v511, %v510
    %v535 = vpack.c.bf16 %v513, %v512
    %v536 = vpack.c.bf16 %v515, %v514
    %v537 = vpack.c.bf16 %v517, %v516
    %v538 = vpack.c.bf16 %v519, %v518
    %v539 = vpack.c.bf16 %v521, %v520
    %v540 = vpack.c.bf16 %v523, %v522
    %v541 = vpack.c.bf16 %v525, %v524
    %v542 = vld [vmem:[%s4] sm:$0xf]
    %v543 = vld [vmem:[%s4 + $0x4] sm:$0xf]
    %v544 = vld [vmem:[%s4 + $0x8] sm:$0xf]
    %v545 = vld [vmem:[%s4 + $0xc] sm:$0xf]
    %v546 = vld [vmem:[%s5] sm:$0x1]
    %v548 = vperm.slane %v546, 0
    %v554 = vunpack.c.l.b16 %v542
    %v555 = vunpack.c.l.b16 %v543
    %v556 = vunpack.c.l.b16 %v544
    %v557 = vunpack.c.l.b16 %v545
    %v558 = vpack.c.b16 %v555, %v554
    %v559 = vpack.c.b16 %v557, %v556
    %v563 = vsel %vm356, %v526, 0
    %v566 = vsel %vm356, %v527, 0
    %v569 = vsel %vm356, %v528, 0
    %v572 = vsel %vm356, %v529, 0
    %v575 = vsel %vm356, %v530, 0
    %v578 = vsel %vm356, %v531, 0
    %v581 = vsel %vm356, %v532, 0
    %v584 = vsel %vm356, %v533, 0
    %v587 = vsel %vm356, %v534, 0
    %v590 = vsel %vm356, %v535, 0
    %v593 = vsel %vm356, %v536, 0
    %v596 = vsel %vm356, %v537, 0
    %v599 = vsel %vm356, %v538, 0
    %v602 = vsel %vm356, %v539, 0
    %v605 = vsel %vm356, %v540, 0
    %v608 = vsel %vm356, %v541, 0
    %610 = vmatpush.bf16.msra.mxu0 0
    %611 = vmatpush.bf16.msra.mxu0 0
    %612 = vmatpush.bf16.msra.mxu0 0
    %613 = vmatpush.bf16.msra.mxu0 0
    %614 = vmatpush.bf16.msra.mxu0 0
    %615 = vmatpush.bf16.msra.mxu0 0
    %616 = vmatpush.bf16.msra.mxu0 %v559
    %617 = vmatpush.bf16.msra.mxu0 %v558
    %618 = vmatmul.bf16.gmra.mxu0 %v563
    %v619 = vpop.f32.mrf.mxu0
    %v620 = vadd.f32 %v548, %v619
    %v621 = vpop.f32.mrf.mxu0
    %v622 = vadd.f32 %v548, %v621
    %623 = vmatmul.bf16.gmra.mxu0 %v566
    %v624 = vpop.f32.mrf.mxu0
    %v625 = vadd.f32 %v548, %v624
    %v626 = vpop.f32.mrf.mxu0
    %v627 = vadd.f32 %v548, %v626
    %628 = vmatmul.bf16.gmra.mxu0 %v569
    %v629 = vpop.f32.mrf.mxu0
    %v630 = vadd.f32 %v548, %v629
    %v631 = vpop.f32.mrf.mxu0
    %v632 = vadd.f32 %v548, %v631
    %633 = vmatmul.bf16.gmra.mxu0 %v572
    %v634 = vpop.f32.mrf.mxu0
    %v635 = vadd.f32 %v548, %v634
    %v636 = vpop.f32.mrf.mxu0
    %v637 = vadd.f32 %v548, %v636
    %638 = vmatmul.bf16.gmra.mxu0 %v575
    %v639 = vpop.f32.mrf.mxu0
    %v640 = vadd.f32 %v548, %v639
    %v641 = vpop.f32.mrf.mxu0
    %v642 = vadd.f32 %v548, %v641
    %643 = vmatmul.bf16.gmra.mxu0 %v578
    %v644 = vpop.f32.mrf.mxu0
    %v645 = vadd.f32 %v548, %v644
    %v646 = vpop.f32.mrf.mxu0
    %v647 = vadd.f32 %v548, %v646
    %648 = vmatmul.bf16.gmra.mxu0 %v581
    %v649 = vpop.f32.mrf.mxu0
    %v650 = vadd.f32 %v548, %v649
    %v651 = vpop.f32.mrf.mxu0
    %v652 = vadd.f32 %v548, %v651
    %653 = vmatmul.bf16.gmra.mxu0 %v584
    %v654 = vpop.f32.mrf.mxu0
    %v655 = vadd.f32 %v548, %v654
    %v656 = vpop.f32.mrf.mxu0
    %v657 = vadd.f32 %v548, %v656
    %658 = vmatmul.bf16.gmra.mxu0 %v587
    %v659 = vpop.f32.mrf.mxu0
    %v660 = vadd.f32 %v548, %v659
    %v661 = vpop.f32.mrf.mxu0
    %v662 = vadd.f32 %v548, %v661
    %663 = vmatmul.bf16.gmra.mxu0 %v590
    %v664 = vpop.f32.mrf.mxu0
    %v665 = vadd.f32 %v548, %v664
    %v666 = vpop.f32.mrf.mxu0
    %v667 = vadd.f32 %v548, %v666
    %668 = vmatmul.bf16.gmra.mxu0 %v593
    %v669 = vpop.f32.mrf.mxu0
    %v670 = vadd.f32 %v548, %v669
    %v671 = vpop.f32.mrf.mxu0
    %v672 = vadd.f32 %v548, %v671
    %673 = vmatmul.bf16.gmra.mxu0 %v596
    %v674 = vpop.f32.mrf.mxu0
    %v675 = vadd.f32 %v548, %v674
    %v676 = vpop.f32.mrf.mxu0
    %v677 = vadd.f32 %v548, %v676
    %678 = vmatmul.bf16.gmra.mxu0 %v599
    %v679 = vpop.f32.mrf.mxu0
    %v680 = vadd.f32 %v548, %v679
    %v681 = vpop.f32.mrf.mxu0
    %v682 = vadd.f32 %v548, %v681
    %683 = vmatmul.bf16.gmra.mxu0 %v602
    %v684 = vpop.f32.mrf.mxu0
    %v685 = vadd.f32 %v548, %v684
    %v686 = vpop.f32.mrf.mxu0
    %v687 = vadd.f32 %v548, %v686
    %688 = vmatmul.bf16.gmra.mxu0 %v605
    %v689 = vpop.f32.mrf.mxu0
    %v690 = vadd.f32 %v548, %v689
    %v691 = vpop.f32.mrf.mxu0
    %v692 = vadd.f32 %v548, %v691
    %693 = vmatmul.bf16.gmra.mxu0 %v608
    %v694 = vpop.f32.mrf.mxu0
    %v695 = vadd.f32 %v548, %v694
    %v696 = vpop.f32.mrf.mxu0
    %v697 = vadd.f32 %v548, %v696
    %698 = vdwg.mxu0
    %699 = vst [vmem:[#allocation2] sm:$0xff] %v620
    %700 = vst [vmem:[#allocation2 + $0x8] sm:$0xff] %v622
    %701 = vst [vmem:[#allocation2 + $0x10] sm:$0xff] %v625
    %702 = vst [vmem:[#allocation2 + $0x18] sm:$0xff] %v627
    %703 = vst [vmem:[#allocation2 + $0x20] sm:$0xff] %v630
    %704 = vst [vmem:[#allocation2 + $0x28] sm:$0xff] %v632
    %705 = vst [vmem:[#allocation2 + $0x30] sm:$0xff] %v635
    %706 = vst [vmem:[#allocation2 + $0x38] sm:$0xff] %v637
    %707 = vst [vmem:[#allocation2 + $0x40] sm:$0xff] %v640
    %708 = vst [vmem:[#allocation2 + $0x48] sm:$0xff] %v642
    %709 = vst [vmem:[#allocation2 + $0x50] sm:$0xff] %v645
    %710 = vst [vmem:[#allocation2 + $0x58] sm:$0xff] %v647
    %711 = vst [vmem:[#allocation2 + $0x60] sm:$0xff] %v650
    %712 = vst [vmem:[#allocation2 + $0x68] sm:$0xff] %v652
    %713 = vst [vmem:[#allocation2 + $0x70] sm:$0xff] %v655
    %714 = vst [vmem:[#allocation2 + $0x78] sm:$0xff] %v657
    %715 = vst [vmem:[#allocation2 + $0x80] sm:$0xff] %v660
    %716 = vst [vmem:[#allocation2 + $0x88] sm:$0xff] %v662
    %717 = vst [vmem:[#allocation2 + $0x90] sm:$0xff] %v665
    %718 = vst [vmem:[#allocation2 + $0x98] sm:$0xff] %v667
    %719 = vst [vmem:[#allocation2 + $0xa0] sm:$0xff] %v670
    %720 = vst [vmem:[#allocation2 + $0xa8] sm:$0xff] %v672
    %721 = vst [vmem:[#allocation2 + $0xb0] sm:$0xff] %v675
    %722 = vst [vmem:[#allocation2 + $0xb8] sm:$0xff] %v677
    %723 = vst [vmem:[#allocation2 + $0xc0] sm:$0xff] %v680
    %724 = vst [vmem:[#allocation2 + $0xc8] sm:$0xff] %v682
    %725 = vst [vmem:[#allocation2 + $0xd0] sm:$0xff] %v685
    %726 = vst [vmem:[#allocation2 + $0xd8] sm:$0xff] %v687
    %727 = vst [vmem:[#allocation2 + $0xe0] sm:$0xff] %v690
    %728 = vst [vmem:[#allocation2 + $0xe8] sm:$0xff] %v692
    %729 = vst [vmem:[#allocation2 + $0xf0] sm:$0xff] %v695
    %730 = vst [vmem:[#allocation2 + $0xf8] sm:$0xff] %v697
    // Predicated region
    $region26: #{tpu_custom_call.1} parent=1 // pred_check
      _
    $region27: #{tpu_custom_call.1} parent=1 // pred_check_branch
      %732 = sbr.rel (0) target = $region29
    $region28: #{tpu_custom_call.1} parent=1 // pred_region
      %734 = vsyncadd [#allocation3], 0
      %s735 = sshll.u32 [#allocation2], 4
      %s736 = int_to_ptr.vmem [resolvable:$true] %s735
      %s737 = sshll.u32 %s6, 4
      %s738 = int_to_ptr.hbm [resolvable:$true] %s737
      %743 = dma.vmem_to_hbm [thread:$0]  %s736, 4096, %s738, [#allocation3], 128, 128, 8
    $region29: #{tpu_custom_call.1} parent=1 // pred_fallthru
      _
    // Predicated region
    $region30: #{tpu_custom_call.1} parent=1 // pred_check
      _
    $region31: #{tpu_custom_call.1} parent=1 // pred_check_branch
      %745 = sbr.rel (0) target = $region33
    $region32: #{tpu_custom_call.1} parent=1 // pred_region
      %747 = dma.done [#allocation3], 4096
    $region33: #{tpu_custom_call.1} parent=1 // pred_fallthru
      _
    %748 = vsyncpa [#allocation3], 1

</llo_original>
